<compile_context>
chip_gen: v5e
topology: v5e:2x2
jax: 0.10.0
libtpu: 0.0.40
codegen_flags: <defaults>
</compile_context>

<pallas_src>
import functools

import jax
import jax.numpy as jnp
from jax.experimental import pallas as pl
from jax.experimental.pallas import tpu as pltpu


def _rnn_fc_kernel(
    x_ref, w_ih_ref, w_hh_ref, b_ref, w_fc_ref, b_fc_ref, out_ref, *, seq_len, batch
):
    """Single-program kernel: batched input projection + unrolled RNN + FC.

    x_ref    : (T*B, D_in)    time-major input, flattened to 2D
    w_ih_ref : (D_in, H)      = W_ih^T
    w_hh_ref : (H, H)         = W_hh^T
    b_ref    : (1, H)         = b_ih + b_hh
    w_fc_ref : (D_out, H)     = W_fc  (row layout, used via VPU reduce)
    b_fc_ref : (1, D_out)
    out_ref  : (B, D_out)
    """
    H = w_hh_ref.shape[0]

    w_hh = w_hh_ref[...]

    # Hoisted input projection for ALL timesteps in one MXU op, bias folded in.
    #   xw[t*B + b, :] = x_t[b] @ W_ih^T + (b_ih + b_hh)
    xw = (
        jnp.dot(x_ref[...], w_ih_ref[...], preferred_element_type=jnp.float32)
        + b_ref[...]
    )  # (T*B, H)

    # Fully unrolled recurrence (seq_len is a static trace-time constant).
    h = jnp.zeros((batch, H), dtype=jnp.float32)
    for t in range(seq_len):
        xw_t = xw[t * batch : (t + 1) * batch, :]  # static slice, (B, H)
        h = jnp.tanh(
            xw_t + jnp.dot(h, w_hh, preferred_element_type=jnp.float32)
        )

    # Final FC with tiny D_out: VPU broadcast-multiply + lane reduction
    # instead of an N=1 MXU matmul.
    #   out[b, o] = sum_h h[b, h] * W_fc[o, h] + b_fc[o]
    w_fc = w_fc_ref[...]  # (D_out, H)
    out_ref[...] = (
        jnp.sum(h[:, None, :] * w_fc[None, :, :], axis=-1) + b_fc_ref[...]
    )


@jax.jit
def rnn_model_forward(x, w_ih, w_hh, b_ih, b_hh, w_fc, b_fc):
    """x: (B, T, D_in) batch-first, like the PyTorch module. Returns (B, D_out)."""
    B, T, D_in = x.shape
    H = w_hh.shape[0]
    D_out = w_fc.shape[0]

    # Time-major then flatten to one contiguous 2D operand for the hoisted
    # input projection: row t*B + b  ==  x[b, t, :].
    x_flat = (
        jnp.transpose(x, (1, 0, 2)).reshape(T * B, D_in).astype(jnp.float32)
    )                                                            # (T*B, D_in)
    w_ih_t = jnp.transpose(w_ih).astype(jnp.float32)             # (D_in, H)
    w_hh_t = jnp.transpose(w_hh).astype(jnp.float32)             # (H, H)
    b_comb = (b_ih + b_hh).reshape(1, H).astype(jnp.float32)     # (1, H)
    w_fc_2d = w_fc.astype(jnp.float32)                           # (D_out, H)
    b_fc_2d = b_fc.reshape(1, D_out).astype(jnp.float32)         # (1, D_out)

    vmem = pl.BlockSpec(memory_space=pltpu.MemorySpace.VMEM)
    kernel = functools.partial(_rnn_fc_kernel, seq_len=T, batch=B)
    return pl.pallas_call(
        kernel,
        out_shape=jax.ShapeDtypeStruct((B, D_out), jnp.float32),
        in_specs=[vmem] * 6,
        out_specs=vmem,
    )(x_flat, w_ih_t, w_hh_t, b_comb, w_fc_2d, b_fc_2d)


def _reference_forward(x, w_ih, w_hh, b_ih, b_hh, w_fc, b_fc):
    """Plain-JAX reference matching torch.nn.RNN + Linear semantics."""
    B, T, _ = x.shape
    H = w_hh.shape[0]
    h = jnp.zeros((B, H), dtype=jnp.float32)
    for t in range(T):
        h = jnp.tanh(x[:, t, :] @ w_ih.T + b_ih + h @ w_hh.T + b_hh)
    return h @ w_fc.T + b_fc


if __name__ == "__main__":
    input_dim = 15
    hidden_dim = 64
    output_dim = 1
    batch = 2
    seq = 8

    key = jax.random.PRNGKey(0)
    kx, k1, k2, k3, k4, k5, k6 = jax.random.split(key, 7)

    # Deterministic parameter init (PyTorch-style uniform(-1/sqrt(H), 1/sqrt(H))).
    bound = 1.0 / jnp.sqrt(jnp.float32(hidden_dim))
    w_ih = jax.random.uniform(k1, (hidden_dim, input_dim), jnp.float32, -bound, bound)
    w_hh = jax.random.uniform(k2, (hidden_dim, hidden_dim), jnp.float32, -bound, bound)
    b_ih = jax.random.uniform(k3, (hidden_dim,), jnp.float32, -bound, bound)
    b_hh = jax.random.uniform(k4, (hidden_dim,), jnp.float32, -bound, bound)
    w_fc = jax.random.uniform(k5, (output_dim, hidden_dim), jnp.float32, -bound, bound)
    b_fc = jax.random.uniform(k6, (output_dim,), jnp.float32, -bound, bound)

    x = jax.random.normal(kx, (batch, seq, input_dim), jnp.float32)

    out = rnn_model_forward(x, w_ih, w_hh, b_ih, b_hh, w_fc, b_fc)
    out = jax.block_until_ready(out)

    ref = _reference_forward(x, w_ih, w_hh, b_ih, b_hh, w_fc, b_fc)
    assert out.shape == (batch, output_dim), out.shape
    assert jnp.allclose(out, ref, atol=1e-5, rtol=1e-5), (out, ref)

    print("KERNEL_OK")
</pallas_src>

<mosaic_0001>
module attributes {stable_mosaic.version = 11 : i64} {
  func.func @_rnn_fc_kernel(%arg0: memref<16x15xf32, #tpu.memory_space<vmem>>, %arg1: memref<15x64xf32, #tpu.memory_space<vmem>>, %arg2: memref<64x64xf32, #tpu.memory_space<vmem>>, %arg3: memref<1x64xf32, #tpu.memory_space<vmem>>, %arg4: memref<1x64xf32, #tpu.memory_space<vmem>>, %arg5: memref<1x1xf32, #tpu.memory_space<vmem>>, %arg6: memref<2x1xf32, #tpu.memory_space<vmem>>) attributes {dimension_semantics = [], scalar_prefetch = 0 : i64, scratch_operands = 0 : i64, tpu.core_type = #tpu.core_type<tc>} {
    %c0 = arith.constant 0 : index
    %c0_0 = arith.constant 0 : index
    %0 = vector.load %arg2[%c0, %c0_0] : memref<64x64xf32, #tpu.memory_space<vmem>>, vector<64x64xf32>
    %c0_1 = arith.constant 0 : index
    %c0_2 = arith.constant 0 : index
    %1 = vector.load %arg0[%c0_1, %c0_2] : memref<16x15xf32, #tpu.memory_space<vmem>>, vector<16x15xf32>
    %c0_3 = arith.constant 0 : index
    %c0_4 = arith.constant 0 : index
    %2 = vector.load %arg1[%c0_3, %c0_4] : memref<15x64xf32, #tpu.memory_space<vmem>>, vector<15x64xf32>
    %cst = arith.constant dense<0.000000e+00> : vector<16x64xf32>
    %3 = tpu.matmul %1, %2, %cst {dimension_numbers = #tpu.dot_dimension_numbers<[1], [0], [0], [1], [0, 0, 1, 1], [], []>} : vector<16x15xf32>, vector<15x64xf32>, vector<16x64xf32> -> vector<16x64xf32>
    %c0_5 = arith.constant 0 : index
    %c0_6 = arith.constant 0 : index
    %4 = vector.load %arg3[%c0_5, %c0_6] : memref<1x64xf32, #tpu.memory_space<vmem>>, vector<1x64xf32>
    %5 = vector.broadcast %4 : vector<1x64xf32> to vector<16x64xf32>
    %6 = arith.addf %3, %5 : vector<16x64xf32>
    %cst_7 = arith.constant 0.000000e+00 : f32
    %7 = vector.broadcast %cst_7 : f32 to vector<2x64xf32>
    %8 = vector.extract_strided_slice %6 {offsets = [0, 0], sizes = [2, 64], strides = [1, 1]} : vector<16x64xf32> to vector<2x64xf32>
    %cst_8 = arith.constant dense<0.000000e+00> : vector<2x64xf32>
    %9 = tpu.matmul %7, %0, %cst_8 {dimension_numbers = #tpu.dot_dimension_numbers<[1], [0], [0], [1], [0, 0, 1, 1], [], []>} : vector<2x64xf32>, vector<64x64xf32>, vector<2x64xf32> -> vector<2x64xf32>
    %10 = arith.addf %8, %9 : vector<2x64xf32>
    %11 = math.tanh %10 : vector<2x64xf32>
    %12 = vector.extract_strided_slice %6 {offsets = [2, 0], sizes = [2, 64], strides = [1, 1]} : vector<16x64xf32> to vector<2x64xf32>
    %cst_9 = arith.constant dense<0.000000e+00> : vector<2x64xf32>
    %13 = tpu.matmul %11, %0, %cst_9 {dimension_numbers = #tpu.dot_dimension_numbers<[1], [0], [0], [1], [0, 0, 1, 1], [], []>} : vector<2x64xf32>, vector<64x64xf32>, vector<2x64xf32> -> vector<2x64xf32>
    %14 = arith.addf %12, %13 : vector<2x64xf32>
    %15 = math.tanh %14 : vector<2x64xf32>
    %16 = vector.extract_strided_slice %6 {offsets = [4, 0], sizes = [2, 64], strides = [1, 1]} : vector<16x64xf32> to vector<2x64xf32>
    %cst_10 = arith.constant dense<0.000000e+00> : vector<2x64xf32>
    %17 = tpu.matmul %15, %0, %cst_10 {dimension_numbers = #tpu.dot_dimension_numbers<[1], [0], [0], [1], [0, 0, 1, 1], [], []>} : vector<2x64xf32>, vector<64x64xf32>, vector<2x64xf32> -> vector<2x64xf32>
    %18 = arith.addf %16, %17 : vector<2x64xf32>
    %19 = math.tanh %18 : vector<2x64xf32>
    %20 = vector.extract_strided_slice %6 {offsets = [6, 0], sizes = [2, 64], strides = [1, 1]} : vector<16x64xf32> to vector<2x64xf32>
    %cst_11 = arith.constant dense<0.000000e+00> : vector<2x64xf32>
    %21 = tpu.matmul %19, %0, %cst_11 {dimension_numbers = #tpu.dot_dimension_numbers<[1], [0], [0], [1], [0, 0, 1, 1], [], []>} : vector<2x64xf32>, vector<64x64xf32>, vector<2x64xf32> -> vector<2x64xf32>
    %22 = arith.addf %20, %21 : vector<2x64xf32>
    %23 = math.tanh %22 : vector<2x64xf32>
    %24 = vector.extract_strided_slice %6 {offsets = [8, 0], sizes = [2, 64], strides = [1, 1]} : vector<16x64xf32> to vector<2x64xf32>
    %cst_12 = arith.constant dense<0.000000e+00> : vector<2x64xf32>
    %25 = tpu.matmul %23, %0, %cst_12 {dimension_numbers = #tpu.dot_dimension_numbers<[1], [0], [0], [1], [0, 0, 1, 1], [], []>} : vector<2x64xf32>, vector<64x64xf32>, vector<2x64xf32> -> vector<2x64xf32>
    %26 = arith.addf %24, %25 : vector<2x64xf32>
    %27 = math.tanh %26 : vector<2x64xf32>
    %28 = vector.extract_strided_slice %6 {offsets = [10, 0], sizes = [2, 64], strides = [1, 1]} : vector<16x64xf32> to vector<2x64xf32>
    %cst_13 = arith.constant dense<0.000000e+00> : vector<2x64xf32>
    %29 = tpu.matmul %27, %0, %cst_13 {dimension_numbers = #tpu.dot_dimension_numbers<[1], [0], [0], [1], [0, 0, 1, 1], [], []>} : vector<2x64xf32>, vector<64x64xf32>, vector<2x64xf32> -> vector<2x64xf32>
    %30 = arith.addf %28, %29 : vector<2x64xf32>
    %31 = math.tanh %30 : vector<2x64xf32>
    %32 = vector.extract_strided_slice %6 {offsets = [12, 0], sizes = [2, 64], strides = [1, 1]} : vector<16x64xf32> to vector<2x64xf32>
    %cst_14 = arith.constant dense<0.000000e+00> : vector<2x64xf32>
    %33 = tpu.matmul %31, %0, %cst_14 {dimension_numbers = #tpu.dot_dimension_numbers<[1], [0], [0], [1], [0, 0, 1, 1], [], []>} : vector<2x64xf32>, vector<64x64xf32>, vector<2x64xf32> -> vector<2x64xf32>
    %34 = arith.addf %32, %33 : vector<2x64xf32>
    %35 = math.tanh %34 : vector<2x64xf32>
    %36 = vector.extract_strided_slice %6 {offsets = [14, 0], sizes = [2, 64], strides = [1, 1]} : vector<16x64xf32> to vector<2x64xf32>
    %cst_15 = arith.constant dense<0.000000e+00> : vector<2x64xf32>
    %37 = tpu.matmul %35, %0, %cst_15 {dimension_numbers = #tpu.dot_dimension_numbers<[1], [0], [0], [1], [0, 0, 1, 1], [], []>} : vector<2x64xf32>, vector<64x64xf32>, vector<2x64xf32> -> vector<2x64xf32>
    %38 = arith.addf %36, %37 : vector<2x64xf32>
    %39 = math.tanh %38 : vector<2x64xf32>
    %c0_16 = arith.constant 0 : index
    %c0_17 = arith.constant 0 : index
    %40 = vector.load %arg4[%c0_16, %c0_17] : memref<1x64xf32, #tpu.memory_space<vmem>>, vector<1x64xf32>
    %41 = vector.shape_cast %39 : vector<2x64xf32> to vector<2x1x64xf32>
    %42 = vector.shape_cast %40 : vector<1x64xf32> to vector<1x1x64xf32>
    %43 = vector.broadcast %42 : vector<1x1x64xf32> to vector<2x1x64xf32>
    %44 = arith.mulf %41, %43 : vector<2x1x64xf32>
    %cst_18 = arith.constant dense<0.000000e+00> : vector<2x1xf32>
    %45 = vector.multi_reduction <add>, %44, %cst_18 [2] : vector<2x1x64xf32> to vector<2x1xf32>
    %c0_19 = arith.constant 0 : index
    %c0_20 = arith.constant 0 : index
    %46 = vector.load %arg5[%c0_19, %c0_20] : memref<1x1xf32, #tpu.memory_space<vmem>>, vector<1x1xf32>
    %47 = vector.broadcast %46 : vector<1x1xf32> to vector<2x1xf32>
    %48 = arith.addf %45, %47 : vector<2x1xf32>
    %c0_21 = arith.constant 0 : index
    %c0_22 = arith.constant 0 : index
    %49 = vector.load %arg6[%c0_21, %c0_22] : memref<2x1xf32, #tpu.memory_space<vmem>>, vector<2x1xf32>
    tpu.vector_store %arg6[%c0_21, %c0_22], %48 {strides = array<i32>} : memref<2x1xf32, #tpu.memory_space<vmem>>, vector<2x1xf32>,
    return
  }
}

</mosaic_0001>

<llo_original>
// kernel: rnn_model_forward.1
$region0: #{rnn_model_forward.1}
  #allocation0 [shape = 'u32[]', space=smem, size = 0x4, offset = 0x4, fixed_abs, tag = 'smem constant byte address 0x4 - core index']
  #allocation1 [shape = 'u32[72,128]{1,0:T(1,128)}', space=vmem, size = 0x9000, scoped, tag = 'internal scratch']
  #allocation2 [shape = 'f32[1,1]{1,0:T(1,128)S(1)}', space=vmem, size = 0x200, scoped, tag = 'scoped memory for rnn_model_forward.1']
  %s0 = inlined_call_operand.vmem [shape: f32[16,15], index: 0, kind: input, shape index: {}]
  %s1 = inlined_call_operand.vmem [shape: f32[15,64], index: 1, kind: input, shape index: {}]
  %s2 = inlined_call_operand.vmem [shape: f32[64,64], index: 2, kind: input, shape index: {}]
  %s3 = inlined_call_operand.vmem [shape: f32[1,64], index: 3, kind: input, shape index: {}]
  %s4 = inlined_call_operand.vmem [shape: f32[1,64], index: 4, kind: input, shape index: {}]
  %s5 = inlined_call_operand.<no memory space> [shape: f32[1,1], index: 5, kind: input, shape index: {}]
  %s6 = inlined_call_operand.vmem [shape: f32[2,1], index: 6, kind: output, shape index: {}]
  %s7 = sld [smem:[#allocation0]]
  $region34: #{rnn_model_forward.1} parent=0
    _
  %s9 = ssub.s32 1, %s7
  %s10 = scalar_select 0, %s9, %s7
  %v11 = vstv %s5
  %12 = vst [vmem:[#allocation2] sm:$0x1] %v11
  // Predicated region
  $region2: #{rnn_model_forward.1} parent=0 // pred_check
    _
  $region3: #{rnn_model_forward.1} parent=0 // pred_check_branch
    %14 = sbr.rel (0) target = $region5
  $region4: #{rnn_model_forward.1} parent=0 // pred_region
    _
  $region5: #{rnn_model_forward.1} parent=0 // pred_fallthru
    _
  // Predicated region
  $region6: #{rnn_model_forward.1} parent=0 // pred_check
    _
  $region7: #{rnn_model_forward.1} parent=0 // pred_check_branch
    %16 = sbr.rel (0) target = $region9
  $region8: #{rnn_model_forward.1} parent=0 // pred_region
    _
  $region9: #{rnn_model_forward.1} parent=0 // pred_fallthru
    _
  // Predicated region
  $region10: #{rnn_model_forward.1} parent=0 // pred_check
    _
  $region11: #{rnn_model_forward.1} parent=0 // pred_check_branch
    %18 = sbr.rel (0) target = $region13
  $region12: #{rnn_model_forward.1} parent=0 // pred_region
    _
  $region13: #{rnn_model_forward.1} parent=0 // pred_fallthru
    _
  // Predicated region
  $region14: #{rnn_model_forward.1} parent=0 // pred_check
    _
  $region15: #{rnn_model_forward.1} parent=0 // pred_check_branch
    %20 = sbr.rel (0) target = $region17
  $region16: #{rnn_model_forward.1} parent=0 // pred_region
    _
  $region17: #{rnn_model_forward.1} parent=0 // pred_fallthru
    _
  // Predicated region
  $region18: #{rnn_model_forward.1} parent=0 // pred_check
    _
  $region19: #{rnn_model_forward.1} parent=0 // pred_check_branch
    %22 = sbr.rel (0) target = $region21
  $region20: #{rnn_model_forward.1} parent=0 // pred_region
    _
  $region21: #{rnn_model_forward.1} parent=0 // pred_fallthru
    _
  // Predicated region
  $region22: #{rnn_model_forward.1} parent=0 // pred_check
    _
  $region23: #{rnn_model_forward.1} parent=0 // pred_check_branch
    %24 = sbr.rel (0) target = $region25
  $region24: #{rnn_model_forward.1} parent=0 // pred_region
    _
  $region25: #{rnn_model_forward.1} parent=0 // pred_fallthru
    _
  %v25 = vld [vmem:[%s2] sm:$0xff]
  %v26 = vld [vmem:[%s2 + $0x8] sm:$0xff]
  %v27 = vld [vmem:[%s2 + $0x10] sm:$0xff]
  %v28 = vld [vmem:[%s2 + $0x18] sm:$0xff]
  %v29 = vld [vmem:[%s2 + $0x20] sm:$0xff]
  %v30 = vld [vmem:[%s2 + $0x28] sm:$0xff]
  %v31 = vld [vmem:[%s2 + $0x30] sm:$0xff]
  %v32 = vld [vmem:[%s2 + $0x38] sm:$0xff]
  %v33 = vld [vmem:[%s0] sm:$0xff]
  %v34 = vld [vmem:[%s0 + $0x8] sm:$0xff]
  %v35 = vld [vmem:[%s1] sm:$0xff]
  %v36 = vld [vmem:[%s1 + $0x8] sm:$0x7f]
  %v37 = vld [vmem:[%s3] sm:$0x1]
  %v39 = vperm.slane %v37, 0
  %vm41 = vcmask 121856
  %v43 = vsel %vm41, %v33, 0
  %v46 = vsel %vm41, %v34, 0
  %vm48 = vcmask 1046528
  %v50 = vsel %vm48, %v36, 0
  %52 = vmatpush.msra.mxu0 0.0
  %53 = vmatpush.msra.mxu0 0.0
  %54 = vmatpush.msra.mxu0 0.0
  %55 = vmatpush.msra.mxu0 0.0
  %56 = vmatpush.msra.mxu0 0.0
  %57 = vmatpush.msra.mxu0 0.0
  %58 = vmatpush.msra.mxu0 0.0
  %59 = vmatpush.msra.mxu0 0.0
  %60 = vmatpush.msra.mxu0 0.0
  %61 = vmatpush.msra.mxu0 0.0
  %62 = vmatpush.msra.mxu0 0.0
  %63 = vmatpush.msra.mxu0 0.0
  %64 = vmatpush.msra.mxu0 0.0
  %65 = vmatpush.msra.mxu0 0.0
  %66 = vmatpush.msra.mxu0 %v50
  %67 = vmatpush.msra.mxu0 %v35
  %68 = vmatmul.f32.gmra.mxu0 %v43
  %v69 = vpop.f32.mrf.mxu0
  %v70 = vadd.f32 %v39, %v69
  %71 = vmatmul.f32.gmra.mxu0 %v46
  %v72 = vpop.f32.mrf.mxu0
  %v73 = vadd.f32 %v39, %v72
  %74 = vdwg.mxu0
  %vm75 = vcmask 523264
  %v77 = vsel %vm75, 0.0, 0
  %79 = vmatpush.msra.mxu0 0.0
  %80 = vmatpush.msra.mxu0 0.0
  %81 = vmatpush.msra.mxu0 0.0
  %82 = vmatpush.msra.mxu0 0.0
  %83 = vmatpush.msra.mxu0 0.0
  %84 = vmatpush.msra.mxu0 0.0
  %85 = vmatpush.msra.mxu0 0.0
  %86 = vmatpush.msra.mxu0 0.0
  %87 = vmatpush.msra.mxu0 %v32
  %88 = vmatpush.msra.mxu0 %v31
  %89 = vmatpush.msra.mxu0 %v30
  %90 = vmatpush.msra.mxu0 %v29
  %91 = vmatpush.msra.mxu0 %v28
  %92 = vmatpush.msra.mxu0 %v27
  %93 = vmatpush.msra.mxu0 %v26
  %94 = vmatpush.msra.mxu0 %v25
  %95 = vmatmul.f32.gmra.mxu0 %v77
  %v96 = vpop.f32.mrf.mxu0
  %v97 = vadd.f32 0.0, %v96
  %98 = vdwg.mxu0
  %v99 = vadd.f32 %v70, %v97
  %v100 = vtanh.pop %v99
  %v102 = vsel %vm75, %v100, 0
  %104 = vmatpush.msra.mxu0 0.0
  %105 = vmatpush.msra.mxu0 0.0
  %106 = vmatpush.msra.mxu0 0.0
  %107 = vmatpush.msra.mxu0 0.0
  %108 = vmatpush.msra.mxu0 0.0
  %109 = vmatpush.msra.mxu0 0.0
  %110 = vmatpush.msra.mxu0 0.0
  %111 = vmatpush.msra.mxu0 0.0
  %112 = vmatpush.msra.mxu0 %v32
  %113 = vmatpush.msra.mxu0 %v31
  %114 = vmatpush.msra.mxu0 %v30
  %115 = vmatpush.msra.mxu0 %v29
  %116 = vmatpush.msra.mxu0 %v28
  %117 = vmatpush.msra.mxu0 %v27
  %118 = vmatpush.msra.mxu0 %v26
  %119 = vmatpush.msra.mxu0 %v25
  %120 = vmatmul.f32.gmra.mxu0 %v102
  %v121 = vpop.f32.mrf.mxu0
  %v122 = vadd.f32 0.0, %v121
  %123 = vdwg.mxu0
  %v125 = vrot.slane %v122, 6
  %v127 = vadd.f32 %v70, %v125
  %v128 = vtanh.pop %v127
  %v130 = vrot.slane %v128, 2
  %v131 = vsel %vm75, %v130, 0
  %133 = vmatpush.msra.mxu0 0.0
  %134 = vmatpush.msra.mxu0 0.0
  %135 = vmatpush.msra.mxu0 0.0
  %136 = vmatpush.msra.mxu0 0.0
  %137 = vmatpush.msra.mxu0 0.0
  %138 = vmatpush.msra.mxu0 0.0
  %139 = vmatpush.msra.mxu0 0.0
  %140 = vmatpush.msra.mxu0 0.0
  %141 = vmatpush.msra.mxu0 %v32
  %142 = vmatpush.msra.mxu0 %v31
  %143 = vmatpush.msra.mxu0 %v30
  %144 = vmatpush.msra.mxu0 %v29
  %145 = vmatpush.msra.mxu0 %v28
  %146 = vmatpush.msra.mxu0 %v27
  %147 = vmatpush.msra.mxu0 %v26
  %148 = vmatpush.msra.mxu0 %v25
  %149 = vmatmul.f32.gmra.mxu0 %v131
  %v150 = vpop.f32.mrf.mxu0
  %v151 = vadd.f32 0.0, %v150
  %152 = vdwg.mxu0
  %v154 = vrot.slane %v151, 4
  %v156 = vadd.f32 %v70, %v154
  %v157 = vtanh.pop %v156
  %v159 = vrot.slane %v157, 4
  %v160 = vsel %vm75, %v159, 0
  %162 = vmatpush.msra.mxu0 0.0
  %163 = vmatpush.msra.mxu0 0.0
  %164 = vmatpush.msra.mxu0 0.0
  %165 = vmatpush.msra.mxu0 0.0
  %166 = vmatpush.msra.mxu0 0.0
  %167 = vmatpush.msra.mxu0 0.0
  %168 = vmatpush.msra.mxu0 0.0
  %169 = vmatpush.msra.mxu0 0.0
  %170 = vmatpush.msra.mxu0 %v32
  %171 = vmatpush.msra.mxu0 %v31
  %172 = vmatpush.msra.mxu0 %v30
  %173 = vmatpush.msra.mxu0 %v29
  %174 = vmatpush.msra.mxu0 %v28
  %175 = vmatpush.msra.mxu0 %v27
  %176 = vmatpush.msra.mxu0 %v26
  %177 = vmatpush.msra.mxu0 %v25
  %178 = vmatmul.f32.gmra.mxu0 %v160
  %v179 = vpop.f32.mrf.mxu0
  %v180 = vadd.f32 0.0, %v179
  %181 = vdwg.mxu0
  %v183 = vrot.slane %v180, 2
  %v185 = vadd.f32 %v70, %v183
  %v186 = vtanh.pop %v185
  %v188 = vrot.slane %v186, 6
  %v189 = vsel %vm75, %v188, 0
  %191 = vmatpush.msra.mxu0 0.0
  %192 = vmatpush.msra.mxu0 0.0
  %193 = vmatpush.msra.mxu0 0.0
  %194 = vmatpush.msra.mxu0 0.0
  %195 = vmatpush.msra.mxu0 0.0
  %196 = vmatpush.msra.mxu0 0.0
  %197 = vmatpush.msra.mxu0 0.0
  %198 = vmatpush.msra.mxu0 0.0
  %199 = vmatpush.msra.mxu0 %v32
  %200 = vmatpush.msra.mxu0 %v31
  %201 = vmatpush.msra.mxu0 %v30
  %202 = vmatpush.msra.mxu0 %v29
  %203 = vmatpush.msra.mxu0 %v28
  %204 = vmatpush.msra.mxu0 %v27
  %205 = vmatpush.msra.mxu0 %v26
  %206 = vmatpush.msra.mxu0 %v25
  %207 = vmatmul.f32.gmra.mxu0 %v189
  %v208 = vpop.f32.mrf.mxu0
  %v209 = vadd.f32 0.0, %v208
  %210 = vdwg.mxu0
  %v211 = vadd.f32 %v73, %v209
  %v212 = vtanh.pop %v211
  %v214 = vsel %vm75, %v212, 0
  %216 = vmatpush.msra.mxu0 0.0
  %217 = vmatpush.msra.mxu0 0.0
  %218 = vmatpush.msra.mxu0 0.0
  %219 = vmatpush.msra.mxu0 0.0
  %220 = vmatpush.msra.mxu0 0.0
  %221 = vmatpush.msra.mxu0 0.0
  %222 = vmatpush.msra.mxu0 0.0
  %223 = vmatpush.msra.mxu0 0.0
  %224 = vmatpush.msra.mxu0 %v32
  %225 = vmatpush.msra.mxu0 %v31
  %226 = vmatpush.msra.mxu0 %v30
  %227 = vmatpush.msra.mxu0 %v29
  %228 = vmatpush.msra.mxu0 %v28
  %229 = vmatpush.msra.mxu0 %v27
  %230 = vmatpush.msra.mxu0 %v26
  %231 = vmatpush.msra.mxu0 %v25
  %232 = vmatmul.f32.gmra.mxu0 %v214
  %v233 = vpop.f32.mrf.mxu0
  %v234 = vadd.f32 0.0, %v233
  %235 = vdwg.mxu0
  %v237 = vrot.slane %v234, 6
  %v239 = vadd.f32 %v73, %v237
  %v240 = vtanh.pop %v239
  %v242 = vrot.slane %v240, 2
  %v243 = vsel %vm75, %v242, 0
  %245 = vmatpush.msra.mxu0 0.0
  %246 = vmatpush.msra.mxu0 0.0
  %247 = vmatpush.msra.mxu0 0.0
  %248 = vmatpush.msra.mxu0 0.0
  %249 = vmatpush.msra.mxu0 0.0
  %250 = vmatpush.msra.mxu0 0.0
  %251 = vmatpush.msra.mxu0 0.0
  %252 = vmatpush.msra.mxu0 0.0
  %253 = vmatpush.msra.mxu0 %v32
  %254 = vmatpush.msra.mxu0 %v31
  %255 = vmatpush.msra.mxu0 %v30
  %256 = vmatpush.msra.mxu0 %v29
  %257 = vmatpush.msra.mxu0 %v28
  %258 = vmatpush.msra.mxu0 %v27
  %259 = vmatpush.msra.mxu0 %v26
  %260 = vmatpush.msra.mxu0 %v25
  %261 = vmatmul.f32.gmra.mxu0 %v243
  %v262 = vpop.f32.mrf.mxu0
  %v263 = vadd.f32 0.0, %v262
  %264 = vdwg.mxu0
  %v266 = vrot.slane %v263, 4
  %v268 = vadd.f32 %v73, %v266
  %v269 = vtanh.pop %v268
  %v271 = vrot.slane %v269, 4
  %v272 = vsel %vm75, %v271, 0
  %274 = vmatpush.msra.mxu0 0.0
  %275 = vmatpush.msra.mxu0 0.0
  %276 = vmatpush.msra.mxu0 0.0
  %277 = vmatpush.msra.mxu0 0.0
  %278 = vmatpush.msra.mxu0 0.0
  %279 = vmatpush.msra.mxu0 0.0
  %280 = vmatpush.msra.mxu0 0.0
  %281 = vmatpush.msra.mxu0 0.0
  %282 = vmatpush.msra.mxu0 %v32
  %283 = vmatpush.msra.mxu0 %v31
  %284 = vmatpush.msra.mxu0 %v30
  %285 = vmatpush.msra.mxu0 %v29
  %286 = vmatpush.msra.mxu0 %v28
  %287 = vmatpush.msra.mxu0 %v27
  %288 = vmatpush.msra.mxu0 %v26
  %289 = vmatpush.msra.mxu0 %v25
  %290 = vmatmul.f32.gmra.mxu0 %v272
  %v291 = vpop.f32.mrf.mxu0
  %v292 = vadd.f32 0.0, %v291
  %293 = vdwg.mxu0
  %v295 = vrot.slane %v292, 2
  %v297 = vadd.f32 %v73, %v295
  %v298 = vtanh.pop %v297
  %v299 = vld [vmem:[%s4] sm:$0x1]
  %301 = vst [vmem:[#allocation1] sm:$0xff] %v298
  %s302 = scalar_lea.vmem [#allocation1], 6
  %v303 = vld [vmem:[%s302] ss:$9 sm:$0xff]
  %s304 = scalar_lea.vmem [#allocation1], 7
  %v305 = vld [vmem:[%s304] ss:$9 sm:$0xff]
  %v308 = vmul.f32 %v303, %v299
  %v309 = vmul.f32 %v305, %v299
  %vm310 = vcmask 516096
  %v311 = vsel %vm310, %v308, 0.0
  %312 = vadd.xlane.f32.xlu0 %v311
  %v313 = vpop.xlane.xlu0 %312
  %v314 = vsel %vm310, %v309, 0.0
  %315 = vadd.xlane.f32.xlu0 %v314
  %v316 = vpop.xlane.xlu0 %315
  %v317 = vld [vmem:[#allocation2] sm:$0x1]
  %v319 = vperm.slane %v317, 0
  %v320 = vlaneseq
  %v321 = vshrl.u32 %v320, 7
  %323 = vset.pattern.permute.xlu0 %v321
  %324 = vperm.xlu0 %323, %v319
  %v325 = vpop.permute.xlu0 %324
  %v327 = vadd.f32 %v313, %v325
  %v328 = vadd.f32 %v316, %v325
  %v331 = vrot.slane %v328, 7
  %vm332 = vcmask 1041409
  %v333 = vsel %vm332, %v331, %v327
  %vm335 = vcmask 1024
  %336 = vst.msk [vmem:[%s6] sm:$0x3] %vm335, %v333
  // Predicated region
  $region26: #{rnn_model_forward.1} parent=0 // pred_check
    _
  $region27: #{rnn_model_forward.1} parent=0 // pred_check_branch
    %338 = sbr.rel (0) target = $region29
  $region28: #{rnn_model_forward.1} parent=0 // pred_region
    _
  $region29: #{rnn_model_forward.1} parent=0 // pred_fallthru
    _
  // Predicated region
  $region30: #{rnn_model_forward.1} parent=0 // pred_check
    _
  $region31: #{rnn_model_forward.1} parent=0 // pred_check_branch
    %340 = sbr.rel (0) target = $region33
  $region32: #{rnn_model_forward.1} parent=0 // pred_region
    _
  $region33: #{rnn_model_forward.1} parent=0 // pred_fallthru
    _

</llo_original>
